<compile_context>
chip_gen: v7x
topology: tpu7x:2x2x1
jax: 0.10.0
libtpu: 0.0.40
codegen_flags: <defaults>
</compile_context>

<pallas_src>
import functools

import jax
import jax.numpy as jnp
from jax.experimental import pallas as pl
from jax.experimental.pallas import tpu as pltpu


def _round_up(x: int, m: int) -> int:
    return ((x + m - 1) // m) * m


def nnl_kernel(x_ref, w1_ref, b1_ref, w2_ref, b2_ref, o_ref):
    # layer1: (TB, Kp) @ (Kp, Np) + (1, Np)  -> MXU, f32 accumulation
    h = jnp.dot(x_ref[...], w1_ref[...], preferred_element_type=jnp.float32)
    h = h + b1_ref[...]
    # sigmoid(x) == 0.5 * tanh(0.5 * x) + 0.5:
    #   tanh runs in the EUP slot (co-issues with VPU/MXU work), avoids the
    #   f32 VALU divide and the exp(-h) -> inf path of 1/(1+exp(-h)).
    h = 0.5 * jnp.tanh(0.5 * h) + 0.5
    # layer2: (TB, Np) @ (Np, Np) + (1, Np)  -> MXU, f32 accumulation
    o = jnp.dot(h, w2_ref[...], preferred_element_type=jnp.float32)
    o = o + b2_ref[...]
    o_ref[...] = o.astype(o_ref.dtype)


@functools.partial(jax.jit, static_argnames=("block_b",))
def nnl_forward(x, w1, b1, w2, b2, *, block_b: int = 512):
    """Fused forward pass of NNL.

    x : (B, N + N*N) float32
    w1: (N + N*N, N) float32   (transposed vs. PyTorch's (N, N+N*N))
    b1: (1, N)       float32
    w2: (N, N)       float32
    b2: (1, N)       float32
    returns (B, N) float32
    """
    B, K = x.shape
    N = w1.shape[1]

    # Lane-dense padding: features -> multiple of 128 lanes, batch tile -> multiple
    # of 8 sublanes. Padded lanes/rows are zero so they contribute nothing.
    Kp = _round_up(K, 128)
    Np = _round_up(N, 128)
    TB = min(block_b, _round_up(B, 8))
    Bp = _round_up(B, TB)

    dt = x.dtype
    xp = jnp.zeros((Bp, Kp), dt).at[:B, :K].set(x)
    w1p = jnp.zeros((Kp, Np), dt).at[:K, :N].set(w1)
    b1p = jnp.zeros((1, Np), dt).at[:, :N].set(b1.reshape(1, N))
    w2p = jnp.zeros((Np, Np), dt).at[:N, :N].set(w2)
    b2p = jnp.zeros((1, Np), dt).at[:, :N].set(b2.reshape(1, N))

    grid = (Bp // TB,)

    cost = pl.CostEstimate(
        flops=2 * Bp * Kp * Np + 2 * Bp * Np * Np,
        transcendentals=Bp * Np,
        bytes_accessed=(xp.size + w1p.size + b1p.size + w2p.size + b2p.size
                        + Bp * Np) * 4,
    )

    out = pl.pallas_call(
        nnl_kernel,
        out_shape=jax.ShapeDtypeStruct((Bp, Np), dt),
        grid=grid,
        in_specs=[
            pl.BlockSpec((TB, Kp), lambda i: (i, 0)),   # x: streamed per batch tile
            pl.BlockSpec((Kp, Np), lambda i: (0, 0)),   # w1: VMEM-resident across grid
            pl.BlockSpec((1, Np), lambda i: (0, 0)),    # b1: resident
            pl.BlockSpec((Np, Np), lambda i: (0, 0)),   # w2: resident
            pl.BlockSpec((1, Np), lambda i: (0, 0)),    # b2: resident
        ],
        out_specs=pl.BlockSpec((TB, Np), lambda i: (i, 0)),
        compiler_params=pltpu.CompilerParams(
            dimension_semantics=("parallel",),          # batch axis -> both TCs on v7x
            vmem_limit_bytes=48 * 1024 * 1024,          # headroom for larger TB / N
        ),
        cost_estimate=cost,
    )(xp, w1p, b1p, w2p, b2p)

    return out[:B, :N]


def nnl_reference(x, w1, b1, w2, b2):
    h = jnp.dot(x, w1) + b1
    h = jax.nn.sigmoid(h)
    return jnp.dot(h, w2) + b2


def init_params(key, N):
    """Deterministic init mimicking nn.Linear's U(-1/sqrt(fan_in), 1/sqrt(fan_in))."""
    k1, k2, k3, k4 = jax.random.split(key, 4)
    fan1 = N + N * N
    lim1 = 1.0 / jnp.sqrt(fan1)
    lim2 = 1.0 / jnp.sqrt(N)
    w1 = jax.random.uniform(k1, (fan1, N), jnp.float32, -lim1, lim1)
    b1 = jax.random.uniform(k2, (1, N), jnp.float32, -lim1, lim1)
    w2 = jax.random.uniform(k3, (N, N), jnp.float32, -lim2, lim2)
    b2 = jax.random.uniform(k4, (1, N), jnp.float32, -lim2, lim2)
    return w1, b1, w2, b2


if __name__ == "__main__":
    key = jax.random.PRNGKey(0)
    N = 8           # number of graph nodes
    kx, kb, kp = jax.random.split(key, 3)
    w1, b1, w2, b2 = init_params(kp, N)

    # (1) tiny batch, as in the module's predict()-style use:
    #     each row is concat(assets (N,), flattened liability matrix (N*N,)).
    B_small = 2
    x_small = jax.random.normal(kx, (B_small, N + N * N), dtype=jnp.float32)
    out_small = jax.block_until_ready(nnl_forward(x_small, w1, b1, w2, b2))
    ref_small = nnl_reference(x_small, w1, b1, w2, b2)
    assert out_small.shape == (B_small, N)
    assert jnp.allclose(out_small, ref_small, atol=1e-5, rtol=1e-5)

    # (2) amortized path: many independent forwards batched into ONE pallas_call,
    #     exercising the multi-step batch grid with resident weights + pipelining.
    B_big = 300
    x_big = jax.random.normal(kb, (B_big, N + N * N), dtype=jnp.float32)
    out_big = jax.block_until_ready(nnl_forward(x_big, w1, b1, w2, b2, block_b=128))
    ref_big = nnl_reference(x_big, w1, b1, w2, b2)
    assert out_big.shape == (B_big, N)
    assert jnp.allclose(out_big, ref_big, atol=1e-5, rtol=1e-5)

    # predict()'s trailing softmax over the bailout scores is cheap wrapper-side glue.
    _ = jax.block_until_ready(jax.nn.softmax(out_small[0]))

    # TODO(synk): graph liability-matrix construction (get_liability_matrix) is
    # graph-library glue outside the hot path; only forward() is fused as a kernel.
    print("KERNEL_OK")
</pallas_src>

<mosaic_0001>
module attributes {stable_mosaic.version = 11 : i64} {
  func.func @nnl_kernel(%arg0: i32, %arg1: memref<8x128xf32, #tpu.memory_space<vmem>>, %arg2: memref<128x128xf32, #tpu.memory_space<vmem>>, %arg3: memref<1x128xf32, #tpu.memory_space<vmem>>, %arg4: memref<128x128xf32, #tpu.memory_space<vmem>>, %arg5: memref<1x128xf32, #tpu.memory_space<vmem>>, %arg6: memref<8x128xf32, #tpu.memory_space<vmem>>) attributes {dimension_semantics = [#tpu.dimension_semantics<parallel>], iteration_bounds = array<i64: 1>, scalar_prefetch = 0 : i64, scratch_operands = 0 : i64, tpu.core_type = #tpu.core_type<tc>, window_params = [{transform_indices = @transform_0, window_bounds = array<i64: 8, 128>}, {pipeline_mode = #tpu.pipeline_mode<synchronous>, transform_indices = @transform_1, window_bounds = array<i64: 128, 128>}, {pipeline_mode = #tpu.pipeline_mode<synchronous>, transform_indices = @transform_2, window_bounds = array<i64: 1, 128>}, {pipeline_mode = #tpu.pipeline_mode<synchronous>, transform_indices = @transform_3, window_bounds = array<i64: 128, 128>}, {pipeline_mode = #tpu.pipeline_mode<synchronous>, transform_indices = @transform_4, window_bounds = array<i64: 1, 128>}, {transform_indices = @transform_5, window_bounds = array<i64: 8, 128>}]} {
    %c0 = arith.constant 0 : index
    %c0_0 = arith.constant 0 : index
    %0 = vector.load %arg1[%c0, %c0_0] : memref<8x128xf32, #tpu.memory_space<vmem>>, vector<8x128xf32>
    %c0_1 = arith.constant 0 : index
    %c0_2 = arith.constant 0 : index
    %1 = vector.load %arg2[%c0_1, %c0_2] : memref<128x128xf32, #tpu.memory_space<vmem>>, vector<128x128xf32>
    %cst = arith.constant dense<0.000000e+00> : vector<8x128xf32>
    %2 = tpu.matmul %0, %1, %cst {dimension_numbers = #tpu.dot_dimension_numbers<[1], [0], [0], [1], [0, 0, 1, 1], [], []>} : vector<8x128xf32>, vector<128x128xf32>, vector<8x128xf32> -> vector<8x128xf32>
    %c0_3 = arith.constant 0 : index
    %c0_4 = arith.constant 0 : index
    %3 = vector.load %arg3[%c0_3, %c0_4] : memref<1x128xf32, #tpu.memory_space<vmem>>, vector<1x128xf32>
    %4 = vector.broadcast %3 : vector<1x128xf32> to vector<8x128xf32>
    %5 = arith.addf %2, %4 : vector<8x128xf32>
    %cst_5 = arith.constant 5.000000e-01 : f32
    %6 = vector.broadcast %cst_5 : f32 to vector<8x128xf32>
    %7 = arith.mulf %6, %5 : vector<8x128xf32>
    %8 = math.tanh %7 : vector<8x128xf32>
    %cst_6 = arith.constant 5.000000e-01 : f32
    %9 = vector.broadcast %cst_6 : f32 to vector<8x128xf32>
    %10 = arith.mulf %9, %8 : vector<8x128xf32>
    %cst_7 = arith.constant 5.000000e-01 : f32
    %11 = vector.broadcast %cst_7 : f32 to vector<8x128xf32>
    %12 = arith.addf %10, %11 : vector<8x128xf32>
    %c0_8 = arith.constant 0 : index
    %c0_9 = arith.constant 0 : index
    %13 = vector.load %arg4[%c0_8, %c0_9] : memref<128x128xf32, #tpu.memory_space<vmem>>, vector<128x128xf32>
    %cst_10 = arith.constant dense<0.000000e+00> : vector<8x128xf32>
    %14 = tpu.matmul %12, %13, %cst_10 {dimension_numbers = #tpu.dot_dimension_numbers<[1], [0], [0], [1], [0, 0, 1, 1], [], []>} : vector<8x128xf32>, vector<128x128xf32>, vector<8x128xf32> -> vector<8x128xf32>
    %c0_11 = arith.constant 0 : index
    %c0_12 = arith.constant 0 : index
    %15 = vector.load %arg5[%c0_11, %c0_12] : memref<1x128xf32, #tpu.memory_space<vmem>>, vector<1x128xf32>
    %16 = vector.broadcast %15 : vector<1x128xf32> to vector<8x128xf32>
    %17 = arith.addf %14, %16 : vector<8x128xf32>
    %c0_13 = arith.constant 0 : index
    %c0_14 = arith.constant 0 : index
    %18 = vector.load %arg6[%c0_13, %c0_14] : memref<8x128xf32, #tpu.memory_space<vmem>>, vector<8x128xf32>
    tpu.vector_store %arg6[%c0_13, %c0_14], %17 {strides = array<i32>} : memref<8x128xf32, #tpu.memory_space<vmem>>, vector<8x128xf32>,
    return
  }
  func.func @transform_0(%arg0: i32) -> (i32, i32) {
    %c0_i32 = arith.constant 0 : i32
    %c0_i32_0 = arith.constant 0 : i32
    return %arg0, %c0_i32 : i32, i32
  }
  func.func @transform_1(%arg0: i32) -> (i32, i32) {
    %c0_i32 = arith.constant 0 : i32
    %c0_i32_0 = arith.constant 0 : i32
    %c0_i32_1 = arith.constant 0 : i32
    return %c0_i32, %c0_i32_0 : i32, i32
  }
  func.func @transform_2(%arg0: i32) -> (i32, i32) {
    %c0_i32 = arith.constant 0 : i32
    %c0_i32_0 = arith.constant 0 : i32
    %c0_i32_1 = arith.constant 0 : i32
    return %c0_i32, %c0_i32_0 : i32, i32
  }
  func.func @transform_3(%arg0: i32) -> (i32, i32) {
    %c0_i32 = arith.constant 0 : i32
    %c0_i32_0 = arith.constant 0 : i32
    %c0_i32_1 = arith.constant 0 : i32
    return %c0_i32, %c0_i32_0 : i32, i32
  }
  func.func @transform_4(%arg0: i32) -> (i32, i32) {
    %c0_i32 = arith.constant 0 : i32
    %c0_i32_0 = arith.constant 0 : i32
    %c0_i32_1 = arith.constant 0 : i32
    return %c0_i32, %c0_i32_0 : i32, i32
  }
  func.func @transform_5(%arg0: i32) -> (i32, i32) {
    %c0_i32 = arith.constant 0 : i32
    %c0_i32_0 = arith.constant 0 : i32
    return %arg0, %c0_i32 : i32, i32
  }
}

</mosaic_0001>

<llo_original>
// kernel: nnl_forward.1
$region0: #{nnl_forward.1}
  #allocation0 [shape = 'u32[]', space=smem, size = 0x4, offset = 0x4, fixed_abs, tag = 'smem constant byte address 0x4 - core index']
  #allocation1 [shape = 'u32[144,128]{1,0:T(1,128)}', space=vmem, size = 0x12000, scoped, tag = 'internal scratch']
  %s0 = inlined_call_operand.vmem [shape: f32[8,128], index: 0, kind: input, shape index: {}]
  %s1 = inlined_call_operand.vmem [shape: f32[128,128], index: 1, kind: input, shape index: {}]
  %s2 = inlined_call_operand.vmem [shape: f32[1,128], index: 2, kind: input, shape index: {}]
  %s3 = inlined_call_operand.vmem [shape: f32[128,128], index: 3, kind: input, shape index: {}]
  %s4 = inlined_call_operand.vmem [shape: f32[1,128], index: 4, kind: input, shape index: {}]
  %s5 = inlined_call_operand.vmem [shape: f32[8,128], index: 5, kind: output, shape index: {}]
  %s6 = sld [smem:[#allocation0]]
  $region30: #{nnl_forward.1} parent=0
    _
  %s8 = ssub.s32 1, %s6
  %s9 = scalar_select 0, %s8, %s6
  // Predicated region
  $region2: #{nnl_forward.1} parent=0 // pred_check
    _
  $region3: #{nnl_forward.1} parent=0 // pred_check_branch
    %11 = sbr.rel (0) target = $region5
  $region4: #{nnl_forward.1} parent=0 // pred_region
    _
  $region5: #{nnl_forward.1} parent=0 // pred_fallthru
    _
  // Predicated region
  $region6: #{nnl_forward.1} parent=0 // pred_check
    _
  $region7: #{nnl_forward.1} parent=0 // pred_check_branch
    %13 = sbr.rel (0) target = $region9
  $region8: #{nnl_forward.1} parent=0 // pred_region
    _
  $region9: #{nnl_forward.1} parent=0 // pred_fallthru
    _
  // Predicated region
  $region10: #{nnl_forward.1} parent=0 // pred_check
    _
  $region11: #{nnl_forward.1} parent=0 // pred_check_branch
    %15 = sbr.rel (0) target = $region13
  $region12: #{nnl_forward.1} parent=0 // pred_region
    _
  $region13: #{nnl_forward.1} parent=0 // pred_fallthru
    _
  // Predicated region
  $region14: #{nnl_forward.1} parent=0 // pred_check
    _
  $region15: #{nnl_forward.1} parent=0 // pred_check_branch
    %17 = sbr.rel (0) target = $region17
  $region16: #{nnl_forward.1} parent=0 // pred_region
    _
  $region17: #{nnl_forward.1} parent=0 // pred_fallthru
    _
  // Predicated region
  $region18: #{nnl_forward.1} parent=0 // pred_check
    _
  $region19: #{nnl_forward.1} parent=0 // pred_check_branch
    %19 = sbr.rel (0) target = $region21
  $region20: #{nnl_forward.1} parent=0 // pred_region
    _
  $region21: #{nnl_forward.1} parent=0 // pred_fallthru
    _
  %v20 = vld [vmem:[%s0] sm:$0xff]
  %v21 = vld [vmem:[%s1] sm:$0xff]
  %v22 = vld [vmem:[%s1 + $0x8] sm:$0xff]
  %v23 = vld [vmem:[%s1 + $0x10] sm:$0xff]
  %v24 = vld [vmem:[%s1 + $0x18] sm:$0xff]
  %v25 = vld [vmem:[%s1 + $0x20] sm:$0xff]
  %v26 = vld [vmem:[%s1 + $0x28] sm:$0xff]
  %v27 = vld [vmem:[%s1 + $0x30] sm:$0xff]
  %v28 = vld [vmem:[%s1 + $0x38] sm:$0xff]
  %v29 = vld [vmem:[%s1 + $0x40] sm:$0xff]
  %v30 = vld [vmem:[%s1 + $0x48] sm:$0xff]
  %v31 = vld [vmem:[%s1 + $0x50] sm:$0xff]
  %v32 = vld [vmem:[%s1 + $0x58] sm:$0xff]
  %v33 = vld [vmem:[%s1 + $0x60] sm:$0xff]
  %v34 = vld [vmem:[%s1 + $0x68] sm:$0xff]
  %v35 = vld [vmem:[%s1 + $0x70] sm:$0xff]
  %v36 = vld [vmem:[%s1 + $0x78] sm:$0xff]
  %v37 = vld [vmem:[%s2] sm:$0x1]
  %v39 = vlaneseq
  %v40 = vshrl.u32 %v39, 7
  %v41 = vsub.s32 0, %v40
  %v42 = vrot.slane %v37, %v41
  %44 = vmatprep.subr.mxu0 0.0
  %45 = vmatpush1.msra.mxu0 %v21
  %46 = vmatprep.subr.mxu0 0.0
  %47 = vmatpush1.msra.mxu0 %v22
  %48 = vmatprep.subr.mxu0 0.0
  %49 = vmatpush1.msra.mxu0 %v23
  %50 = vmatprep.subr.mxu0 0.0
  %51 = vmatpush1.msra.mxu0 %v24
  %52 = vmatprep.subr.mxu0 0.0
  %53 = vmatpush1.msra.mxu0 %v25
  %54 = vmatprep.subr.mxu0 0.0
  %55 = vmatpush1.msra.mxu0 %v26
  %56 = vmatprep.subr.mxu0 0.0
  %57 = vmatpush1.msra.mxu0 %v27
  %58 = vmatprep.subr.mxu0 0.0
  %59 = vmatpush1.msra.mxu0 %v28
  %60 = vmatprep.subr.mxu0 0.0
  %61 = vmatpush1.msra.mxu0 %v29
  %62 = vmatprep.subr.mxu0 0.0
  %63 = vmatpush1.msra.mxu0 %v30
  %64 = vmatprep.subr.mxu0 0.0
  %65 = vmatpush1.msra.mxu0 %v31
  %66 = vmatprep.subr.mxu0 0.0
  %67 = vmatpush1.msra.mxu0 %v32
  %68 = vmatprep.subr.mxu0 0.0
  %69 = vmatpush1.msra.mxu0 %v33
  %70 = vmatprep.subr.mxu0 0.0
  %71 = vmatpush1.msra.mxu0 %v34
  %72 = vmatprep.subr.mxu0 0.0
  %73 = vmatpush1.msra.mxu0 %v35
  %74 = vmatprep.subr.mxu0 0.0
  %75 = vmatpush1.msra.mxu0 %v36
  %76 = vmatprep.subr.mxu0 0.0
  %77 = vmatpush1.msra.mxu0 0.0
  %78 = vmatprep.subr.mxu0 0.0
  %79 = vmatpush1.msra.mxu0 0.0
  %80 = vmatprep.subr.mxu0 0.0
  %81 = vmatpush1.msra.mxu0 0.0
  %82 = vmatprep.subr.mxu0 0.0
  %83 = vmatpush1.msra.mxu0 0.0
  %84 = vmatprep.subr.mxu0 0.0
  %85 = vmatpush1.msra.mxu0 0.0
  %86 = vmatprep.subr.mxu0 0.0
  %87 = vmatpush1.msra.mxu0 0.0
  %88 = vmatprep.subr.mxu0 0.0
  %89 = vmatpush1.msra.mxu0 0.0
  %90 = vmatprep.subr.mxu0 0.0
  %91 = vmatpush1.msra.mxu0 0.0
  %92 = vmatprep.subr.mxu0 0.0
  %93 = vmatpush1.msra.mxu0 0.0
  %94 = vmatprep.subr.mxu0 0.0
  %95 = vmatpush1.msra.mxu0 0.0
  %96 = vmatprep.subr.mxu0 0.0
  %97 = vmatpush1.msra.mxu0 0.0
  %98 = vmatprep.subr.mxu0 0.0
  %99 = vmatpush1.msra.mxu0 0.0
  %100 = vmatprep.subr.mxu0 0.0
  %101 = vmatpush1.msra.mxu0 0.0
  %102 = vmatprep.subr.mxu0 0.0
  %103 = vmatpush1.msra.mxu0 0.0
  %104 = vmatprep.subr.mxu0 0.0
  %105 = vmatpush1.msra.mxu0 0.0
  %106 = vmatprep.subr.mxu0 0.0
  %107 = vmatpush1.msra.mxu0 0.0
  %108 = vmatprep.mubr.f32.mxu0 0.0
  %109 = vmatmul.mubr.f32.gmra.mrb[0].mxu0 %v20
  %v110 = vpop.f32.mrb[0].mxu0
  %v111 = vadd.f32 %v42, %v110
  %v112 = vpop.f32.mrb[0].mxu0
  %113 = vdwg.mxu0
  %v114 = vmul.f32 %v111, 0.5
  %v115 = vtanh.pop %v114
  %v116 = vmul.f32 %v115, 0.5
  %v117 = vadd.f32 %v116, 0.5
  %v118 = vld [vmem:[%s3] sm:$0xff]
  %v119 = vld [vmem:[%s3 + $0x8] sm:$0xff]
  %v120 = vld [vmem:[%s3 + $0x10] sm:$0xff]
  %v121 = vld [vmem:[%s3 + $0x18] sm:$0xff]
  %v122 = vld [vmem:[%s3 + $0x20] sm:$0xff]
  %v123 = vld [vmem:[%s3 + $0x28] sm:$0xff]
  %v124 = vld [vmem:[%s3 + $0x30] sm:$0xff]
  %v125 = vld [vmem:[%s3 + $0x38] sm:$0xff]
  %v126 = vld [vmem:[%s3 + $0x40] sm:$0xff]
  %v127 = vld [vmem:[%s3 + $0x48] sm:$0xff]
  %v128 = vld [vmem:[%s3 + $0x50] sm:$0xff]
  %v129 = vld [vmem:[%s3 + $0x58] sm:$0xff]
  %v130 = vld [vmem:[%s3 + $0x60] sm:$0xff]
  %v131 = vld [vmem:[%s3 + $0x68] sm:$0xff]
  %v132 = vld [vmem:[%s3 + $0x70] sm:$0xff]
  %v133 = vld [vmem:[%s3 + $0x78] sm:$0xff]
  %v134 = vld [vmem:[%s4] sm:$0x1]
  %v136 = vlaneseq
  %v137 = vshrl.u32 %v136, 7
  %v138 = vsub.s32 0, %v137
  %v139 = vrot.slane %v134, %v138
  %141 = vmatprep.subr.mxu0 0.0
  %142 = vmatpush1.msra.mxu0 %v118
  %143 = vmatprep.subr.mxu0 0.0
  %144 = vmatpush1.msra.mxu0 %v119
  %145 = vmatprep.subr.mxu0 0.0
  %146 = vmatpush1.msra.mxu0 %v120
  %147 = vmatprep.subr.mxu0 0.0
  %148 = vmatpush1.msra.mxu0 %v121
  %149 = vmatprep.subr.mxu0 0.0
  %150 = vmatpush1.msra.mxu0 %v122
  %151 = vmatprep.subr.mxu0 0.0
  %152 = vmatpush1.msra.mxu0 %v123
  %153 = vmatprep.subr.mxu0 0.0
  %154 = vmatpush1.msra.mxu0 %v124
  %155 = vmatprep.subr.mxu0 0.0
  %156 = vmatpush1.msra.mxu0 %v125
  %157 = vmatprep.subr.mxu0 0.0
  %158 = vmatpush1.msra.mxu0 %v126
  %159 = vmatprep.subr.mxu0 0.0
  %160 = vmatpush1.msra.mxu0 %v127
  %161 = vmatprep.subr.mxu0 0.0
  %162 = vmatpush1.msra.mxu0 %v128
  %163 = vmatprep.subr.mxu0 0.0
  %164 = vmatpush1.msra.mxu0 %v129
  %165 = vmatprep.subr.mxu0 0.0
  %166 = vmatpush1.msra.mxu0 %v130
  %167 = vmatprep.subr.mxu0 0.0
  %168 = vmatpush1.msra.mxu0 %v131
  %169 = vmatprep.subr.mxu0 0.0
  %170 = vmatpush1.msra.mxu0 %v132
  %171 = vmatprep.subr.mxu0 0.0
  %172 = vmatpush1.msra.mxu0 %v133
  %173 = vmatprep.subr.mxu0 0.0
  %174 = vmatpush1.msra.mxu0 0.0
  %175 = vmatprep.subr.mxu0 0.0
  %176 = vmatpush1.msra.mxu0 0.0
  %177 = vmatprep.subr.mxu0 0.0
  %178 = vmatpush1.msra.mxu0 0.0
  %179 = vmatprep.subr.mxu0 0.0
  %180 = vmatpush1.msra.mxu0 0.0
  %181 = vmatprep.subr.mxu0 0.0
  %182 = vmatpush1.msra.mxu0 0.0
  %183 = vmatprep.subr.mxu0 0.0
  %184 = vmatpush1.msra.mxu0 0.0
  %185 = vmatprep.subr.mxu0 0.0
  %186 = vmatpush1.msra.mxu0 0.0
  %187 = vmatprep.subr.mxu0 0.0
  %188 = vmatpush1.msra.mxu0 0.0
  %189 = vmatprep.subr.mxu0 0.0
  %190 = vmatpush1.msra.mxu0 0.0
  %191 = vmatprep.subr.mxu0 0.0
  %192 = vmatpush1.msra.mxu0 0.0
  %193 = vmatprep.subr.mxu0 0.0
  %194 = vmatpush1.msra.mxu0 0.0
  %195 = vmatprep.subr.mxu0 0.0
  %196 = vmatpush1.msra.mxu0 0.0
  %197 = vmatprep.subr.mxu0 0.0
  %198 = vmatpush1.msra.mxu0 0.0
  %199 = vmatprep.subr.mxu0 0.0
  %200 = vmatpush1.msra.mxu0 0.0
  %201 = vmatprep.subr.mxu0 0.0
  %202 = vmatpush1.msra.mxu0 0.0
  %203 = vmatprep.subr.mxu0 0.0
  %204 = vmatpush1.msra.mxu0 0.0
  %205 = vmatprep.mubr.f32.mxu0 0.0
  %206 = vmatmul.mubr.f32.gmra.mrb[0].mxu0 %v117
  %v207 = vpop.f32.mrb[0].mxu0
  %v208 = vadd.f32 %v139, %v207
  %v209 = vpop.f32.mrb[0].mxu0
  %210 = vdwg.mxu0
  %211 = vst [vmem:[%s5] sm:$0xff] %v208
  // Predicated region
  $region22: #{nnl_forward.1} parent=0 // pred_check
    _
  $region23: #{nnl_forward.1} parent=0 // pred_check_branch
    %213 = sbr.rel (0) target = $region25
  $region24: #{nnl_forward.1} parent=0 // pred_region
    _
  $region25: #{nnl_forward.1} parent=0 // pred_fallthru
    _
  // Predicated region
  $region26: #{nnl_forward.1} parent=0 // pred_check
    _
  $region27: #{nnl_forward.1} parent=0 // pred_check_branch
    %215 = sbr.rel (0) target = $region29
  $region28: #{nnl_forward.1} parent=0 // pred_region
    _
  $region29: #{nnl_forward.1} parent=0 // pred_fallthru
    _

</llo_original>
